<compile_context>
chip_gen: v7x
topology: tpu7x:2x2x1
jax: 0.10.0
libtpu: 0.0.40
codegen_flags: <defaults>
</compile_context>

<pallas_src>
import math

import jax
import jax.numpy as jnp
from jax.experimental import pallas as pl
from jax.experimental.pallas import tpu as pltpu


_INV_SQRT2 = 0.7071067811865476
_SQRT_2_OVER_PI = 0.7978845608028654


def _gelu_f32(h, approximate):
    """GELU on an f32 tile. approximate=False matches torch's default erf GELU."""
    if approximate:
        c = jnp.float32(_SQRT_2_OVER_PI)
        return 0.5 * h * (1.0 + jnp.tanh(c * (h + jnp.float32(0.044715) * h * h * h)))
    return 0.5 * h * (1.0 + jax.lax.erf(h * jnp.float32(_INV_SQRT2)))


def _make_kernel(mode, approximate):
    """mode:
        'single'  -> one H step; compute and store directly (no accumulator).
        'f32_out' -> multi H step; accumulate directly into the f32 output block.
        'scratch' -> multi H step; f32 VMEM scratch accumulator (non-f32 output).
    Returns (kernel_fn, uses_scratch)."""
    if mode == "single":
        def kernel(x_ref, w1_ref, b1_ref, w2_ref, b2_ref, o_ref):
            h = jnp.dot(x_ref[...], w1_ref[...], preferred_element_type=jnp.float32)
            h = _gelu_f32(h + b1_ref[...].astype(jnp.float32), approximate)
            # dropout: eval-mode identity (see module-level comment)
            y = jnp.dot(h.astype(w2_ref.dtype), w2_ref[...],
                        preferred_element_type=jnp.float32)
            o_ref[...] = (y + b2_ref[...].astype(jnp.float32)).astype(o_ref.dtype)
        return kernel, False

    if mode == "f32_out":
        def kernel(x_ref, w1_ref, b1_ref, w2_ref, b2_ref, o_ref):
            h_idx = pl.program_id(1)
            h = jnp.dot(x_ref[...], w1_ref[...], preferred_element_type=jnp.float32)
            h = _gelu_f32(h + b1_ref[...].astype(jnp.float32), approximate)
            y = jnp.dot(h.astype(w2_ref.dtype), w2_ref[...],
                        preferred_element_type=jnp.float32)

            @pl.when(h_idx == 0)
            def _():
                o_ref[...] = y + b2_ref[...].astype(jnp.float32)

            @pl.when(h_idx != 0)
            def _():
                o_ref[...] += y
        return kernel, False

    def kernel(x_ref, w1_ref, b1_ref, w2_ref, b2_ref, o_ref, acc_ref):
        h_idx = pl.program_id(1)

        @pl.when(h_idx == 0)
        def _():
            acc_ref[...] = jnp.zeros_like(acc_ref)

        h = jnp.dot(x_ref[...], w1_ref[...], preferred_element_type=jnp.float32)
        h = _gelu_f32(h + b1_ref[...].astype(jnp.float32), approximate)
        acc_ref[...] += jnp.dot(h.astype(w2_ref.dtype), w2_ref[...],
                                preferred_element_type=jnp.float32)

        @pl.when(h_idx == pl.num_programs(1) - 1)
        def _():
            o_ref[...] = (acc_ref[...] + b2_ref[...].astype(jnp.float32)
                          ).astype(o_ref.dtype)
    return kernel, True


def _vmem_capacity_bytes():
    """Physical VMEM of the attached TPU; conservative fallback if unavailable."""
    try:
        info = pltpu.get_tpu_info()
        cap = getattr(info, "vmem_capacity_bytes", None)
        if cap:
            return int(cap)
    except Exception:
        pass
    return 64 << 20  # conservative fallback (v7x per-TensorCore budget)


def _round_up(x, m):
    return ((x + m - 1) // m) * m


def _largest_divisor_tile(total, target):
    """Largest divisor of `total` that is <= target, preferring multiples of 128."""
    target = max(1, min(int(target), total))
    fallback = 1
    for t in range(target, 0, -1):
        if total % t == 0:
            if t % 128 == 0 or t == total:
                return t
            if fallback == 1:
                fallback = t
    return fallback


def feed_forward_block(x, w1, b1, w2, b2, *,
                       row_tile=512, intermediate_tile=None,
                       compute_dtype=None, gelu_approximate=False,
                       weight_buffer_count=2):
    """x: (batch, seq, d_model). Returns same shape, dtype of x.

    w1: (d_model, intermediate), b1: (intermediate,)
    w2: (intermediate, d_model), b2: (d_model,)
    row_tile:          tokens per grid step (primary tuning knob; clamped to the
                       padded token count and to the dtype sublane multiple).
    intermediate_tile: H tile per reduction step. None -> auto: keep W1/W2
                       fully resident in VMEM when they fit (single H step),
                       otherwise 1024 on 128-MiB chips / 512 on 64-MiB chips.
    compute_dtype:     e.g. jnp.bfloat16 -> bf16 MXU rate + halved weight
                       traffic (f32 accumulation is kept). Recommended on
                       v6e/v7x; default None preserves exact f32 semantics.
    gelu_approximate:  True -> tanh GELU (routes to the EUP slot); False
                       matches torch's default erf GELU exactly.
    weight_buffer_count: >2 attaches pl.Buffered(k) to the weight BlockSpecs
                       for deeper prefetch (only where VMEM headroom exists).
    """
    B, S, D = x.shape
    Dw, H = w1.shape
    assert Dw == D and w2.shape == (H, D) and b1.shape == (H,) and b2.shape == (D,)
    M = B * S
    out_dtype = x.dtype

    if compute_dtype is not None:
        x = x.astype(compute_dtype)
        w1 = w1.astype(compute_dtype)
        w2 = w2.astype(compute_dtype)

    x_isz = jnp.dtype(x.dtype).itemsize
    w_isz = jnp.dtype(w1.dtype).itemsize
    out_isz = jnp.dtype(out_dtype).itemsize

    # dtype-dependent sublane minimum for the row tile (packed-tile rule)
    sub = {4: 8, 2: 16, 1: 32}.get(x_isz, 8)

    # --- VMEM budget, per generation ---------------------------------------
    physical_vmem = _vmem_capacity_bytes()
    small_vmem = physical_vmem <= (64 << 20)            # v7x-class per-TC VMEM
    vmem_cap = min(physical_vmem * 7 // 8, 110 << 20)   # ~56 MiB v7x, ~110 MiB v5e/v6e
    budget = int(vmem_cap * 0.8)

    wbuf = max(2, int(weight_buffer_count))

    def vmem_est(tm_, th_, with_scratch=True):
        est = 2 * x_isz * tm_ * D                        # x tile (double-buffered)
        est += wbuf * w_isz * (D * th_ + th_ + th_ * D)  # w1 + b1 + w2 tiles
        est += 2 * w_isz * D                             # b2
        est += 2 * out_isz * tm_ * D                     # output tile
        est += (4 + w_isz) * tm_ * th_                   # f32 GELU intermediate + cast copy
        if with_scratch:
            est += 4 * tm_ * D                           # f32 accumulator scratch
        return est

    # --- row tile ------------------------------------------------------------
    tm = max(sub, min(int(row_tile), _round_up(M, sub)))
    tm = _round_up(tm, sub)

    # --- intermediate (H) tile ------------------------------------------------
    if intermediate_tile is None:
        if vmem_est(tm, H, with_scratch=False) <= budget:
            th = H  # resident-weights fast path: weights DMA'd once, one H step
        else:
            th = _largest_divisor_tile(H, 512 if small_vmem else 1024)
    else:
        th = _largest_divisor_tile(H, intermediate_tile)

    # Fit: shrink the row tile (then the H tile) until the footprint fits.
    while vmem_est(tm, th) > budget and tm > sub:
        tm = max(sub, (tm // 2) // sub * sub)
    while vmem_est(tm, th) > budget and th > 128 and th != H:
        th = _largest_divisor_tile(H, th // 2)

    M_pad = _round_up(M, tm)
    n_h = H // th

    x2d = x.reshape(M, D)
    if M_pad != M:
        x2d = jnp.pad(x2d, ((0, M_pad - M), (0, 0)))
    b1_2d = b1.reshape(1, H)
    b2_2d = b2.reshape(1, D)

    grid = (M_pad // tm, n_h)

    if n_h == 1:
        mode = "single"
    elif out_dtype == jnp.float32:
        mode = "f32_out"
    else:
        mode = "scratch"
    kernel, use_scratch = _make_kernel(mode, gelu_approximate)

    est = vmem_est(tm, th, with_scratch=use_scratch)
    vmem_limit = int(min(max(est * 5 // 4 + (2 << 20), 32 << 20), vmem_cap))

    # Deeper weight-tile prefetch only on request (keeps default path simple).
    w_spec_kwargs = {} if wbuf == 2 else {"pipeline_mode": pl.Buffered(wbuf)}

    # Weights are re-streamed once per row tile unless fully resident.
    weight_reads = 1 if th == H else (M_pad // tm)
    cost = pl.CostEstimate(
        flops=4 * M_pad * D * H,                 # two matmuls, 2*M*D*H each
        transcendentals=M_pad * H,               # GELU over the intermediate activation
        bytes_accessed=(x_isz * M_pad * D
                        + weight_reads * w_isz * 2 * D * H
                        + w_isz * (H + D)
                        + out_isz * M_pad * D),
    )

    scratch_shapes = [pltpu.VMEM((tm, D), jnp.float32)] if use_scratch else []

    # TODO(synk): on v7x megacore, when M_pad // tm < 2 the second TensorCore is
    # idle with the row axis "parallel"; sharding H via pl.core_map + a
    # cross-core add would use both cores, but is not needed for these shapes.
    out2d = pl.pallas_call(
        kernel,
        out_shape=jax.ShapeDtypeStruct((M_pad, D), out_dtype),
        grid_spec=pltpu.PrefetchScalarGridSpec(
            num_scalar_prefetch=0,
            grid=grid,
            in_specs=[
                pl.BlockSpec((tm, D), lambda i, h: (i, 0)),                    # x rows
                pl.BlockSpec((D, th), lambda i, h: (0, h), **w_spec_kwargs),   # w1 tile
                pl.BlockSpec((1, th), lambda i, h: (0, h)),                    # b1 tile
                pl.BlockSpec((th, D), lambda i, h: (h, 0), **w_spec_kwargs),   # w2 tile
                pl.BlockSpec((1, D), lambda i, h: (0, 0)),                     # b2
            ],
            out_specs=pl.BlockSpec((tm, D), lambda i, h: (i, 0)),
            scratch_shapes=scratch_shapes,
        ),
        compiler_params=pltpu.CompilerParams(
            dimension_semantics=("parallel", "arbitrary"),
            vmem_limit_bytes=vmem_limit,
        ),
        cost_estimate=cost,
    )(x2d, w1, b1_2d, w2, b2_2d)

    if M_pad != M:
        out2d = out2d[:M]
    return out2d.reshape(B, S, D)


def init_params(key, d_model, intermediate_size):
    """Deterministic init mimicking nn.Linear's default uniform(-1/sqrt(fan_in), ...)."""
    k1, k2, k3, k4 = jax.random.split(key, 4)
    bound1 = 1.0 / math.sqrt(d_model)
    bound2 = 1.0 / math.sqrt(intermediate_size)
    # stored pre-transposed as (in_features, out_features) for the kernel
    w1 = jax.random.uniform(k1, (d_model, intermediate_size), jnp.float32,
                            -bound1, bound1)
    b1 = jax.random.uniform(k2, (intermediate_size,), jnp.float32, -bound1, bound1)
    w2 = jax.random.uniform(k3, (intermediate_size, d_model), jnp.float32,
                            -bound2, bound2)
    b2 = jax.random.uniform(k4, (d_model,), jnp.float32, -bound2, bound2)
    return w1, b1, w2, b2


if __name__ == "__main__":
    # Small but lane-dense shapes: (batch=2, seq=8, d_model=128), intermediate=512.
    batch, seq, d_model, intermediate_size = 2, 8, 128, 512
    dropout_p = 0.1  # metadata only; inference -> identity

    key = jax.random.PRNGKey(0)
    kx, kp = jax.random.split(key)
    x = jax.random.normal(kx, (batch, seq, d_model), dtype=jnp.float32)
    w1, b1, w2, b2 = init_params(kp, d_model, intermediate_size)

    # pure-JAX reference (exact-erf GELU, eval-mode dropout = identity)
    ref = jnp.dot(x, w1) + b1
    ref = 0.5 * ref * (1.0 + jax.lax.erf(ref * jnp.float32(_INV_SQRT2)))
    ref = jnp.dot(ref, w2) + b2

    # (a) force the streamed-H reduction path (accumulates into the f32 output)
    out_a = feed_forward_block(x, w1, b1, w2, b2, row_tile=8, intermediate_tile=128)
    out_a = jax.block_until_ready(out_a)
    assert out_a.shape == (batch, seq, d_model)
    assert jnp.allclose(out_a, ref, atol=1e-4, rtol=1e-4), "mismatch (streamed f32 path)"

    # (b) default auto-tiling: weights resident in VMEM, single H step, f32 compute
    out_b = jax.block_until_ready(feed_forward_block(x, w1, b1, w2, b2))
    assert jnp.allclose(out_b, ref, atol=1e-4, rtol=1e-4), "mismatch (resident path)"

    # (c) bf16 compute_dtype (recommended production setting on v6e/v7x):
    #     bf16 MXU rate + halved weight traffic, f32 accumulation retained.
    out_c = jax.block_until_ready(
        feed_forward_block(x, w1, b1, w2, b2, compute_dtype=jnp.bfloat16))
    assert out_c.dtype == jnp.float32
    assert jnp.allclose(out_c, ref, atol=5e-2, rtol=5e-2), "mismatch (bf16 compute)"

    # (d) bf16 activations + streamed H tiles -> exercises the scratch-accumulator
    #     variant (non-f32 output dtype) and the 16-row sublane minimum.
    out_d = jax.block_until_ready(
        feed_forward_block(x.astype(jnp.bfloat16), w1, b1, w2, b2,
                           row_tile=16, intermediate_tile=128))
    assert out_d.dtype == jnp.bfloat16
    assert jnp.allclose(out_d.astype(jnp.float32), ref, atol=7e-2, rtol=7e-2), \
        "mismatch (bf16 scratch path)"

    print("KERNEL_OK")
</pallas_src>

<mosaic_0001>
module attributes {stable_mosaic.version = 11 : i64} {
  func.func @kernel(%arg0: i32, %arg1: i32, %arg2: memref<8x128xf32, #tpu.memory_space<vmem>>, %arg3: memref<128x128xf32, #tpu.memory_space<vmem>>, %arg4: memref<1x128xf32, #tpu.memory_space<vmem>>, %arg5: memref<128x128xf32, #tpu.memory_space<vmem>>, %arg6: memref<1x128xf32, #tpu.memory_space<vmem>>, %arg7: memref<8x128xf32, #tpu.memory_space<vmem>>) attributes {dimension_semantics = [#tpu.dimension_semantics<parallel>, #tpu.dimension_semantics<arbitrary>], iteration_bounds = array<i64: 2, 4>, scalar_prefetch = 0 : i64, scratch_operands = 0 : i64, tpu.core_type = #tpu.core_type<tc>, window_params = [{transform_indices = @transform_0, window_bounds = array<i64: 8, 128>}, {transform_indices = @transform_1, window_bounds = array<i64: 128, 128>}, {transform_indices = @transform_2, window_bounds = array<i64: 1, 128>}, {transform_indices = @transform_3, window_bounds = array<i64: 128, 128>}, {pipeline_mode = #tpu.pipeline_mode<synchronous>, transform_indices = @transform_4, window_bounds = array<i64: 1, 128>}, {transform_indices = @transform_5, window_bounds = array<i64: 8, 128>}]} {
    %c0 = arith.constant 0 : index
    %c0_0 = arith.constant 0 : index
    %0 = vector.load %arg2[%c0, %c0_0] : memref<8x128xf32, #tpu.memory_space<vmem>>, vector<8x128xf32>
    %c0_1 = arith.constant 0 : index
    %c0_2 = arith.constant 0 : index
    %1 = vector.load %arg3[%c0_1, %c0_2] : memref<128x128xf32, #tpu.memory_space<vmem>>, vector<128x128xf32>
    %cst = arith.constant dense<0.000000e+00> : vector<8x128xf32>
    %2 = tpu.matmul %0, %1, %cst {dimension_numbers = #tpu.dot_dimension_numbers<[1], [0], [0], [1], [0, 0, 1, 1], [], []>} : vector<8x128xf32>, vector<128x128xf32>, vector<8x128xf32> -> vector<8x128xf32>
    %c0_3 = arith.constant 0 : index
    %c0_4 = arith.constant 0 : index
    %3 = vector.load %arg4[%c0_3, %c0_4] : memref<1x128xf32, #tpu.memory_space<vmem>>, vector<1x128xf32>
    %4 = vector.broadcast %3 : vector<1x128xf32> to vector<8x128xf32>
    %5 = arith.addf %2, %4 : vector<8x128xf32>
    %cst_5 = arith.constant 5.000000e-01 : f32
    %6 = vector.broadcast %cst_5 : f32 to vector<8x128xf32>
    %7 = arith.mulf %6, %5 : vector<8x128xf32>
    %cst_6 = arith.constant 0.707106769 : f32
    %8 = vector.broadcast %cst_6 : f32 to vector<8x128xf32>
    %9 = arith.mulf %5, %8 : vector<8x128xf32>
    %10 = math.erf %9 : vector<8x128xf32>
    %cst_7 = arith.constant 1.000000e+00 : f32
    %11 = vector.broadcast %cst_7 : f32 to vector<8x128xf32>
    %12 = arith.addf %11, %10 : vector<8x128xf32>
    %13 = arith.mulf %7, %12 : vector<8x128xf32>
    %c0_8 = arith.constant 0 : index
    %c0_9 = arith.constant 0 : index
    %14 = vector.load %arg5[%c0_8, %c0_9] : memref<128x128xf32, #tpu.memory_space<vmem>>, vector<128x128xf32>
    %cst_10 = arith.constant dense<0.000000e+00> : vector<8x128xf32>
    %15 = tpu.matmul %13, %14, %cst_10 {dimension_numbers = #tpu.dot_dimension_numbers<[1], [0], [0], [1], [0, 0, 1, 1], [], []>} : vector<8x128xf32>, vector<128x128xf32>, vector<8x128xf32> -> vector<8x128xf32>
    %c0_i32 = arith.constant 0 : i32
    %16 = arith.cmpi eq, %arg1, %c0_i32 : i32
    %17 = arith.extui %16 : i1 to i32
    %c0_i32_11 = arith.constant 0 : i32
    %18 = arith.cmpi ne, %17, %c0_i32_11 : i32
    scf.if %18 {
      %c0_14 = arith.constant 0 : index
      %c0_15 = arith.constant 0 : index
      %22 = vector.load %arg6[%c0_14, %c0_15] : memref<1x128xf32, #tpu.memory_space<vmem>>, vector<1x128xf32>
      %23 = vector.broadcast %22 : vector<1x128xf32> to vector<8x128xf32>
      %24 = arith.addf %15, %23 : vector<8x128xf32>
      %c0_16 = arith.constant 0 : index
      %c0_17 = arith.constant 0 : index
      %25 = vector.load %arg7[%c0_16, %c0_17] : memref<8x128xf32, #tpu.memory_space<vmem>>, vector<8x128xf32>
      tpu.vector_store %arg7[%c0_16, %c0_17], %24 {strides = array<i32>} : memref<8x128xf32, #tpu.memory_space<vmem>>, vector<8x128xf32>,
    } else {
    }
    %c0_i32_12 = arith.constant 0 : i32
    %19 = arith.cmpi ne, %arg1, %c0_i32_12 : i32
    %20 = arith.extui %19 : i1 to i32
    %c0_i32_13 = arith.constant 0 : i32
    %21 = arith.cmpi ne, %20, %c0_i32_13 : i32
    scf.if %21 {
      %c0_14 = arith.constant 0 : index
      %c0_15 = arith.constant 0 : index
      %22 = vector.load %arg7[%c0_14, %c0_15] : memref<8x128xf32, #tpu.memory_space<vmem>>, vector<8x128xf32>
      %23 = arith.addf %22, %15 : vector<8x128xf32>
      %c0_16 = arith.constant 0 : index
      %c0_17 = arith.constant 0 : index
      %24 = vector.load %arg7[%c0_16, %c0_17] : memref<8x128xf32, #tpu.memory_space<vmem>>, vector<8x128xf32>
      tpu.vector_store %arg7[%c0_16, %c0_17], %23 {strides = array<i32>} : memref<8x128xf32, #tpu.memory_space<vmem>>, vector<8x128xf32>,
    } else {
    }
    return
  }
  func.func @transform_0(%arg0: i32, %arg1: i32) -> (i32, i32) {
    %c0_i32 = arith.constant 0 : i32
    %c0_i32_0 = arith.constant 0 : i32
    return %arg0, %c0_i32 : i32, i32
  }
  func.func @transform_1(%arg0: i32, %arg1: i32) -> (i32, i32) {
    %c0_i32 = arith.constant 0 : i32
    %c0_i32_0 = arith.constant 0 : i32
    return %c0_i32, %arg1 : i32, i32
  }
  func.func @transform_2(%arg0: i32, %arg1: i32) -> (i32, i32) {
    %c0_i32 = arith.constant 0 : i32
    %c0_i32_0 = arith.constant 0 : i32
    return %c0_i32, %arg1 : i32, i32
  }
  func.func @transform_3(%arg0: i32, %arg1: i32) -> (i32, i32) {
    %c0_i32 = arith.constant 0 : i32
    %c0_i32_0 = arith.constant 0 : i32
    return %arg1, %c0_i32 : i32, i32
  }
  func.func @transform_4(%arg0: i32, %arg1: i32) -> (i32, i32) {
    %c0_i32 = arith.constant 0 : i32
    %c0_i32_0 = arith.constant 0 : i32
    %c0_i32_1 = arith.constant 0 : i32
    return %c0_i32, %c0_i32_0 : i32, i32
  }
  func.func @transform_5(%arg0: i32, %arg1: i32) -> (i32, i32) {
    %c0_i32 = arith.constant 0 : i32
    %c0_i32_0 = arith.constant 0 : i32
    return %arg0, %c0_i32 : i32, i32
  }
}

</mosaic_0001>

<llo_original>
// kernel: tpu_custom_call.1
$region0: #{tpu_custom_call.1}
  #allocation0 [shape = 'u32[]', space=smem, size = 0x4, offset = 0x4, fixed_abs, tag = 'smem constant byte address 0x4 - core index']
  #allocation1 [shape = 'u32[144,128]{1,0:T(1,128)}', space=vmem, size = 0x12000, scoped, tag = 'internal scratch']
  %s0 = inlined_call_operand.hbm [shape: f32[16,128], index: 0, kind: input, shape index: {}]
  %s1 = inlined_call_operand.hbm [shape: f32[128,512], index: 1, kind: input, shape index: {}]
  %s2 = inlined_call_operand.vmem [shape: f32[1,512], index: 2, kind: input, shape index: {}]
  %s3 = inlined_call_operand.hbm [shape: f32[512,128], index: 3, kind: input, shape index: {}]
  %s4 = inlined_call_operand.vmem [shape: f32[1,128], index: 4, kind: input, shape index: {}]
  %s5 = inlined_call_operand.hbm [shape: f32[16,128], index: 5, kind: output, shape index: {}]
  %s6 = sld [smem:[#allocation0]]
  $region73: #{tpu_custom_call.1} parent=0
    _
  %s8 = ssub.s32 1, %s6
  %s9 = scalar_select 0, %s8, %s6
  $region1: #{tpu_custom_call.1} parent=0
    #allocation2 [shape = 'u8[8192]{0}', space=vmem, size = 0x2000, scoped, tag = 'input window, operand 0']
    #allocation3 [shape = 's32[2]{0}', space=sflag, size = 0x8, scoped, tag = 'scoped memory for tpu_custom_call.1']
    #allocation4 [shape = 's32[2]{0}', space=sflag, size = 0x8, scoped, tag = 'scoped memory for tpu_custom_call.1']
    #allocation5 [shape = 'u8[131072]{0}', space=vmem, size = 0x20000, scoped, tag = 'input window, operand 1']
    #allocation6 [shape = 's32[2]{0}', space=sflag, size = 0x8, scoped, tag = 'scoped memory for tpu_custom_call.1']
    #allocation7 [shape = 'u8[131072]{0}', space=vmem, size = 0x20000, scoped, tag = 'input window, operand 3']
    #allocation8 [shape = 'u8[8192]{0}', space=vmem, size = 0x2000, scoped, tag = 'output window, operand 0']
    %10 = vsyncpa [#allocation3], 0
    %s11 = scalar_lea.sflag [#allocation3], 1
    %12 = vsyncpa %s11, 0
    %13 = vsyncpa [#allocation6], 0
    %s14 = scalar_lea.sflag [#allocation6], 1
    %15 = vsyncpa %s14, 0
    %16 = vsyncpa [#allocation4], 0
    %s17 = scalar_lea.sflag [#allocation4], 1
    %18 = vsyncpa %s17, 0
    loop: start=0, step=1, limit=10
    $region2: #{tpu_custom_call.1} parent=1 // loop_pre_header
      _
    $region3: #{tpu_custom_call.1} parent=1 // loop_header
      %s20 = sphi 0, %s24
      %p21 = scmp.ge.s32.totalorder %s20, 10
      %s27 = sphi 0, %s39
      %s28 = sphi 0, %s35
      %s29 = sphi 0, %s27
      %s30 = sphi 0, %s28
      %s31 = sphi 0, %s29
      %s32 = sphi 0, %s30
      %s42 = sphi 0, %s44
      %s45 = sphi 0, %s42
      %s46 = sphi 0, %s45
      %s62 = sphi 0, %s46
      %s68 = sphi 0, %s70
      %s71 = sphi 0, %s68
      %s72 = sphi 0, %s71
      %s88 = sphi 0, %s72
      %s94 = sphi 0, %s96
      %s97 = sphi 0, %s94
      %s98 = sphi 0, %s97
      %s114 = sphi 0, %s98
      %s120 = sphi 0, %s122
      %s123 = sphi 0, %s120
      %s124 = sphi 0, %s123
      %s140 = sphi 0, %s124
      %s144 = sphi 0, %s144
      %s146 = sphi 0, %s144
      %s147 = sphi 0, %s146
      %s161 = sphi 0, %s147
      %s167 = sphi 0, %s169
      %s170 = sphi 0, %s167
      %s171 = sphi 0, %s170
      %s187 = sphi 0, %s171
    $region4: #{tpu_custom_call.1} parent=1 // loop_header_branch
      %23 = sbr.rel (%p21) target = $region8
    $region5: #{tpu_custom_call.1} parent=1 // loop_body
      %s25 = ssub.s32 %s20, 1
      %s26 = ssub.s32 %s20, 2
      %s33 = sadd.s32 1, %s28
      %p34 = scmp.ge.s32.totalorder %s33, 4
      %s35 = scalar_select %p34, 0, %s33
      %s36 = sadd.s32 1, %s27
      %s37 = scalar_select %p34, %s36, %s27
      %p38 = scmp.ge.s32.totalorder %s37, 2
      %s39 = scalar_select %p38, 0, %s37
      %s40 = ssub.s32 %s27, %s39
      %p41 = scmp.eq.s32.totalorder %s40, 0
      %s43 = sadd.s32 %s42, 1
      %s44 = scalar_select %p41, %s42, %s43
      %p47 = pneg %p41
      %p48 = scmp.eq.s32.totalorder %s20, 7
      %p49 = por %p47, %p48
      %p50 = scmp.ne.s32.totalorder %s42, %s45
      %p51 = scmp.eq.s32.totalorder %s20, 0
      %p52 = por %p50, %p51
      %p53 = scmp.ne.s32.totalorder %s42, %s45
      %p54 = scmp.eq.s32.totalorder %s25, 7
      %p55 = por %p53, %p54
      %p56 = scmp.ne.s32.totalorder %s45, %s46
      %p57 = scmp.eq.s32.totalorder %s25, 0
      %p58 = por %p56, %p57
      %p59 = scmp.ne.s32.totalorder %s45, %s46
      %p60 = scmp.eq.s32.totalorder %s26, 7
      %p61 = por %p59, %p60
      %p63 = scmp.ne.s32.totalorder %s46, %s62
      %p64 = scmp.eq.s32.totalorder %s26, 0
      %p65 = por %p63, %p64
      %s66 = ssub.s32 %s28, %s35
      %p67 = scmp.eq.s32.totalorder %s66, 0
      %s69 = sadd.s32 %s68, 1
      %s70 = scalar_select %p67, %s68, %s69
      %p73 = pneg %p67
      %p74 = scmp.eq.s32.totalorder %s20, 7
      %p75 = por %p73, %p74
      %p76 = scmp.ne.s32.totalorder %s68, %s71
      %p77 = scmp.eq.s32.totalorder %s20, 0
      %p78 = por %p76, %p77
      %p79 = scmp.ne.s32.totalorder %s68, %s71
      %p80 = scmp.eq.s32.totalorder %s25, 7
      %p81 = por %p79, %p80
      %p82 = scmp.ne.s32.totalorder %s71, %s72
      %p83 = scmp.eq.s32.totalorder %s25, 0
      %p84 = por %p82, %p83
      %p85 = scmp.ne.s32.totalorder %s71, %s72
      %p86 = scmp.eq.s32.totalorder %s26, 7
      %p87 = por %p85, %p86
      %p89 = scmp.ne.s32.totalorder %s72, %s88
      %p90 = scmp.eq.s32.totalorder %s26, 0
      %p91 = por %p89, %p90
      %s92 = ssub.s32 %s28, %s35
      %p93 = scmp.eq.s32.totalorder %s92, 0
      %s95 = sadd.s32 %s94, 1
      %s96 = scalar_select %p93, %s94, %s95
      %p99 = pneg %p93
      %p100 = scmp.eq.s32.totalorder %s20, 7
      %p101 = por %p99, %p100
      %p102 = scmp.ne.s32.totalorder %s94, %s97
      %p103 = scmp.eq.s32.totalorder %s20, 0
      %p104 = por %p102, %p103
      %p105 = scmp.ne.s32.totalorder %s94, %s97
      %p106 = scmp.eq.s32.totalorder %s25, 7
      %p107 = por %p105, %p106
      %p108 = scmp.ne.s32.totalorder %s97, %s98
      %p109 = scmp.eq.s32.totalorder %s25, 0
      %p110 = por %p108, %p109
      %p111 = scmp.ne.s32.totalorder %s97, %s98
      %p112 = scmp.eq.s32.totalorder %s26, 7
      %p113 = por %p111, %p112
      %p115 = scmp.ne.s32.totalorder %s98, %s114
      %p116 = scmp.eq.s32.totalorder %s26, 0
      %p117 = por %p115, %p116
      %s118 = ssub.s32 %s28, %s35
      %p119 = scmp.eq.s32.totalorder %s118, 0
      %s121 = sadd.s32 %s120, 1
      %s122 = scalar_select %p119, %s120, %s121
      %p125 = pneg %p119
      %p126 = scmp.eq.s32.totalorder %s20, 7
      %p127 = por %p125, %p126
      %p128 = scmp.ne.s32.totalorder %s120, %s123
      %p129 = scmp.eq.s32.totalorder %s20, 0
      %p130 = por %p128, %p129
      %p131 = scmp.ne.s32.totalorder %s120, %s123
      %p132 = scmp.eq.s32.totalorder %s25, 7
      %p133 = por %p131, %p132
      %p134 = scmp.ne.s32.totalorder %s123, %s124
      %p135 = scmp.eq.s32.totalorder %s25, 0
      %p136 = por %p134, %p135
      %p137 = scmp.ne.s32.totalorder %s123, %s124
      %p138 = scmp.eq.s32.totalorder %s26, 7
      %p139 = por %p137, %p138
      %p141 = scmp.ne.s32.totalorder %s124, %s140
      %p142 = scmp.eq.s32.totalorder %s26, 0
      %p143 = por %p141, %p142
      %s145 = sadd.s32 %s144, 1
      %p148 = scmp.eq.s32.totalorder %s20, 7
      %p149 = scmp.ne.s32.totalorder %s144, %s146
      %p150 = scmp.eq.s32.totalorder %s20, 0
      %p151 = por %p149, %p150
      %p152 = scmp.ne.s32.totalorder %s144, %s146
      %p153 = scmp.eq.s32.totalorder %s25, 7
      %p154 = por %p152, %p153
      %p155 = scmp.ne.s32.totalorder %s146, %s147
      %p156 = scmp.eq.s32.totalorder %s25, 0
      %p157 = por %p155, %p156
      %p158 = scmp.ne.s32.totalorder %s146, %s147
      %p159 = scmp.eq.s32.totalorder %s26, 7
      %p160 = por %p158, %p159
      %p162 = scmp.ne.s32.totalorder %s147, %s161
      %p163 = scmp.eq.s32.totalorder %s26, 0
      %p164 = por %p162, %p163
      %s165 = ssub.s32 %s27, %s39
      %p166 = scmp.eq.s32.totalorder %s165, 0
      %s168 = sadd.s32 %s167, 1
      %s169 = scalar_select %p166, %s167, %s168
      %p172 = pneg %p166
      %p173 = scmp.eq.s32.totalorder %s20, 7
      %p174 = por %p172, %p173
      %p175 = scmp.ne.s32.totalorder %s167, %s170
      %p176 = scmp.eq.s32.totalorder %s20, 0
      %p177 = por %p175, %p176
      %p178 = scmp.ne.s32.totalorder %s167, %s170
      %p179 = scmp.eq.s32.totalorder %s25, 7
      %p180 = por %p178, %p179
      %p181 = scmp.ne.s32.totalorder %s170, %s171
      %p182 = scmp.eq.s32.totalorder %s25, 0
      %p183 = por %p181, %p182
      %p184 = scmp.ne.s32.totalorder %s170, %s171
      %p185 = scmp.eq.s32.totalorder %s26, 7
      %p186 = por %p184, %p185
      %p188 = scmp.ne.s32.totalorder %s171, %s187
      %p189 = scmp.eq.s32.totalorder %s26, 0
      %p190 = por %p188, %p189
      %p191 = scmp.le.s32.totalorder 1, %s20
      %p192 = scmp.lt.s32.totalorder %s20, 9
      %p193 = pnand %p191, %p192
      %p194 = pneg %p193
      // Predicated region
      $region9: #{tpu_custom_call.1} parent=5 // pred_check
        _
      $region10: #{tpu_custom_call.1} parent=5 // pred_check_branch
        %196 = sbr.rel (%p193) target = $region12
      $region11: #{tpu_custom_call.1} parent=5 // pred_region
        %s197 = ssub.s32 %s20, 1
        // Predicated region
        $region13: #{tpu_custom_call.1} parent=11 // pred_check
          %p198 = pneg %p157
        $region14: #{tpu_custom_call.1} parent=11 // pred_check_branch
          %200 = sbr.rel (%p198) target = $region16
        $region15: #{tpu_custom_call.1} parent=11 // pred_region
          _
        $region16: #{tpu_custom_call.1} parent=11 // pred_fallthru
          _
      $region12: #{tpu_custom_call.1} parent=5 // pred_fallthru
        _
      %p201 = scmp.lt.s32.totalorder %s20, 8
      // Predicated region
      $region17: #{tpu_custom_call.1} parent=5 // pred_check
        %p202 = pneg %p201
      $region18: #{tpu_custom_call.1} parent=5 // pred_check_branch
        %204 = sbr.rel (%p202) target = $region20
      $region19: #{tpu_custom_call.1} parent=5 // pred_region
        // Predicated region
        $region21: #{tpu_custom_call.1} parent=19 // pred_check
          %p205 = pneg %p52
        $region22: #{tpu_custom_call.1} parent=19 // pred_check_branch
          %207 = sbr.rel (%p205) target = $region24
        $region23: #{tpu_custom_call.1} parent=19 // pred_region
          %s208 = sand.u32 %s42, 1
          %s209 = scalar_lea.sflag [#allocation3], %s208
          %s210 = sand.u32 %s42, 1
          %s211 = smul.addr %s210, 8
          %s212 = scalar_lea.vmem [#allocation2], %s211
          %s214 = ssub.s32 128, 128
          %215 = vsyncadd %s209, %s214
          %s216 = smul.addr %s27, 128
          %s217 = scalar_lea.hbm %s0, %s216
          %s219 = sshll.u32 %s212, 4
          %s220 = int_to_ptr.vmem [resolvable:$true] %s219
          %222 = dma.hbm_to_vmem [thread:$0]  %s217, 128, %s220, %s209
        $region24: #{tpu_custom_call.1} parent=19 // pred_fallthru
          _
        // Predicated region
        $region25: #{tpu_custom_call.1} parent=19 // pred_check
          %p223 = pneg %p78
        $region26: #{tpu_custom_call.1} parent=19 // pred_check_branch
          %225 = sbr.rel (%p223) target = $region28
        $region27: #{tpu_custom_call.1} parent=19 // pred_region
          %s226 = sand.u32 %s20, 1
          %s227 = scalar_lea.sflag [#allocation6], %s226
          %s228 = sand.u32 %s68, 1
          %s229 = smul.addr %s228, 128
          %s230 = scalar_lea.vmem [#allocation5], %s229
          %s232 = ssub.s32 2048, 2048
          %233 = vsyncadd %s227, %s232
          %s234 = smul.addr %s28, 128
          %s235 = scalar_lea.hbm %s1, %s234
          %s236 = sshll.u32 %s230, 4
          %s237 = int_to_ptr.vmem [resolvable:$true] %s236
          %242 = dma.hbm_to_vmem [thread:$0]  %s235, 2048, %s237, %s227, 512, 128, 8
        $region28: #{tpu_custom_call.1} parent=19 // pred_fallthru
          _
        // Predicated region
        $region29: #{tpu_custom_call.1} parent=19 // pred_check
          %p243 = pneg %p104
        $region30: #{tpu_custom_call.1} parent=19 // pred_check_branch
          %245 = sbr.rel (%p243) target = $region32
        $region31: #{tpu_custom_call.1} parent=19 // pred_region
          %p246 = scmp.lt.s32.totalorder %s28, 3
          %s247 = scalar_select %p246, %s28, 3
          %s248 = scalar_lea.vmem %s2, %s247
        $region32: #{tpu_custom_call.1} parent=19 // pred_fallthru
          _
        // Predicated region
        $region33: #{tpu_custom_call.1} parent=19 // pred_check
          %p249 = pneg %p130
        $region34: #{tpu_custom_call.1} parent=19 // pred_check_branch
          %251 = sbr.rel (%p249) target = $region36
        $region35: #{tpu_custom_call.1} parent=19 // pred_region
          %s252 = sand.u32 %s20, 1
          %s253 = scalar_lea.sflag [#allocation6], %s252
          %s254 = sand.u32 %s120, 1
          %s255 = smul.addr %s254, 128
          %s256 = scalar_lea.vmem [#allocation7], %s255
          %s257 = smul.u32 16, %s28
          %s259 = ssub.s32 2048, 2048
          %260 = vsyncadd %s253, %s259
          %s261 = smul.addr %s257, 128
          %s262 = scalar_lea.hbm %s3, %s261
          %s263 = sshll.u32 %s256, 4
          %s264 = int_to_ptr.vmem [resolvable:$true] %s263
          %269 = dma.hbm_to_vmem [thread:$0]  %s262, 2048, %s264, %s253, 128, 128, 8
        $region36: #{tpu_custom_call.1} parent=19 // pred_fallthru
          _
      $region20: #{tpu_custom_call.1} parent=5 // pred_fallthru
        _
      %p270 = scmp.le.s32.totalorder 1, %s20
      %p271 = scmp.lt.s32.totalorder %s20, 9
      %p272 = pnand %p270, %p271
      %p273 = pneg %p272
      // Predicated region
      $region37: #{tpu_custom_call.1} parent=5 // pred_check
        _
      $region38: #{tpu_custom_call.1} parent=5 // pred_check_branch
        %275 = sbr.rel (%p272) target = $region40
      $region39: #{tpu_custom_call.1} parent=5 // pred_region
        %s276 = ssub.s32 %s20, 1
        %s277 = sand.u32 %s45, 1
        %s278 = scalar_lea.sflag [#allocation3], %s277
        %s279 = sand.u32 %s45, 1
        %s280 = smul.addr %s279, 8
        %s281 = scalar_lea.vmem [#allocation2], %s280
        // Predicated region
        $region41: #{tpu_custom_call.1} parent=39 // pred_check
          %p282 = pneg %p58
        $region42: #{tpu_custom_call.1} parent=39 // pred_check_branch
          %284 = sbr.rel (%p282) target = $region44
        $region43: #{tpu_custom_call.1} parent=39 // pred_region
          %285 = dma.done %s278, 128
        $region44: #{tpu_custom_call.1} parent=39 // pred_fallthru
          _
        %s286 = sand.u32 %s25, 1
        %s287 = scalar_lea.sflag [#allocation6], %s286
        %s288 = sand.u32 %s71, 1
        %s289 = smul.addr %s288, 128
        %s290 = scalar_lea.vmem [#allocation5], %s289
        // Predicated region
        $region45: #{tpu_custom_call.1} parent=39 // pred_check
          %p291 = pneg %p84
        $region46: #{tpu_custom_call.1} parent=39 // pred_check_branch
          %293 = sbr.rel (%p291) target = $region48
        $region47: #{tpu_custom_call.1} parent=39 // pred_region
          %294 = dma.done %s287, 2048
        $region48: #{tpu_custom_call.1} parent=39 // pred_fallthru
          _
        %s295 = sand.u32 %s25, 1
        %s296 = scalar_lea.sflag [#allocation6], %s295
        %s297 = sand.u32 %s123, 1
        %s298 = smul.addr %s297, 128
        %s299 = scalar_lea.vmem [#allocation7], %s298
        // Predicated region
        $region49: #{tpu_custom_call.1} parent=39 // pred_check
          %p300 = pneg %p136
        $region50: #{tpu_custom_call.1} parent=39 // pred_check_branch
          %302 = sbr.rel (%p300) target = $region52
        $region51: #{tpu_custom_call.1} parent=39 // pred_region
          %303 = dma.done %s296, 2048
        $region52: #{tpu_custom_call.1} parent=39 // pred_fallthru
          _
        %s304 = sand.u32 %s45, 1
        %s305 = scalar_lea.sflag [#allocation3], %s304
        %s306 = sand.u32 %s45, 1
        %s307 = smul.addr %s306, 8
        %s308 = scalar_lea.vmem [#allocation2], %s307
        %p309 = pneg %p58
        %p310 = pneg %p55
        %s311 = sand.u32 %s25, 1
        %s312 = scalar_lea.sflag [#allocation6], %s311
        %s313 = sand.u32 %s71, 1
        %s314 = smul.addr %s313, 128
        %s315 = scalar_lea.vmem [#allocation5], %s314
        %p316 = pneg %p84
        %p317 = pneg %p81
        %p318 = scmp.lt.s32.totalorder %s30, 3
        %s319 = scalar_select %p318, %s30, 3
        %s320 = scalar_lea.vmem %s2, %s319
        %p321 = pneg %p110
        %p322 = pneg %p107
        %s323 = sand.u32 %s25, 1
        %s324 = scalar_lea.sflag [#allocation6], %s323
        %s325 = sand.u32 %s123, 1
        %s326 = smul.addr %s325, 128
        %s327 = scalar_lea.vmem [#allocation7], %s326
        %p328 = pneg %p136
        %p329 = pneg %p133
        %p330 = pneg %p157
        %p331 = pneg %p154
        %p332 = pneg %p183
        %p333 = pneg %p180
        %s334 = sand.u32 %s170, 1
        %s335 = scalar_lea.sflag [#allocation4], %s334
        %s336 = sand.u32 %s170, 1
        %s337 = smul.addr %s336, 8
        %s338 = scalar_lea.vmem [#allocation8], %s337
        %p339 = scmp.lt.s32.totalorder %s30, 3
        %s340 = scalar_select %p339, %s30, 3
        %s341 = scalar_lea.vmem %s2, %s340
        %s342 = smul.u32 16, %s30
        %v343 = vld [vmem:[%s281] sm:$0xff]
        %v344 = vld [vmem:[%s290] sm:$0xff]
        %v345 = vld [vmem:[%s290 + $0x8] sm:$0xff]
        %v346 = vld [vmem:[%s290 + $0x10] sm:$0xff]
        %v347 = vld [vmem:[%s290 + $0x18] sm:$0xff]
        %v348 = vld [vmem:[%s290 + $0x20] sm:$0xff]
        %v349 = vld [vmem:[%s290 + $0x28] sm:$0xff]
        %v350 = vld [vmem:[%s290 + $0x30] sm:$0xff]
        %v351 = vld [vmem:[%s290 + $0x38] sm:$0xff]
        %v352 = vld [vmem:[%s290 + $0x40] sm:$0xff]
        %v353 = vld [vmem:[%s290 + $0x48] sm:$0xff]
        %v354 = vld [vmem:[%s290 + $0x50] sm:$0xff]
        %v355 = vld [vmem:[%s290 + $0x58] sm:$0xff]
        %v356 = vld [vmem:[%s290 + $0x60] sm:$0xff]
        %v357 = vld [vmem:[%s290 + $0x68] sm:$0xff]
        %v358 = vld [vmem:[%s290 + $0x70] sm:$0xff]
        %v359 = vld [vmem:[%s290 + $0x78] sm:$0xff]
        %v360 = vld [vmem:[%s341] sm:$0x1]
        %v362 = vlaneseq
        %v363 = vshrl.u32 %v362, 7
        %v364 = vsub.s32 0, %v363
        %v365 = vrot.slane %v360, %v364
        %367 = vmatprep.subr.mxu0 0.0
        %368 = vmatpush1.msra.mxu0 %v344
        %369 = vmatprep.subr.mxu0 0.0
        %370 = vmatpush1.msra.mxu0 %v345
        %371 = vmatprep.subr.mxu0 0.0
        %372 = vmatpush1.msra.mxu0 %v346
        %373 = vmatprep.subr.mxu0 0.0
        %374 = vmatpush1.msra.mxu0 %v347
        %375 = vmatprep.subr.mxu0 0.0
        %376 = vmatpush1.msra.mxu0 %v348
        %377 = vmatprep.subr.mxu0 0.0
        %378 = vmatpush1.msra.mxu0 %v349
        %379 = vmatprep.subr.mxu0 0.0
        %380 = vmatpush1.msra.mxu0 %v350
        %381 = vmatprep.subr.mxu0 0.0
        %382 = vmatpush1.msra.mxu0 %v351
        %383 = vmatprep.subr.mxu0 0.0
        %384 = vmatpush1.msra.mxu0 %v352
        %385 = vmatprep.subr.mxu0 0.0
        %386 = vmatpush1.msra.mxu0 %v353
        %387 = vmatprep.subr.mxu0 0.0
        %388 = vmatpush1.msra.mxu0 %v354
        %389 = vmatprep.subr.mxu0 0.0
        %390 = vmatpush1.msra.mxu0 %v355
        %391 = vmatprep.subr.mxu0 0.0
        %392 = vmatpush1.msra.mxu0 %v356
        %393 = vmatprep.subr.mxu0 0.0
        %394 = vmatpush1.msra.mxu0 %v357
        %395 = vmatprep.subr.mxu0 0.0
        %396 = vmatpush1.msra.mxu0 %v358
        %397 = vmatprep.subr.mxu0 0.0
        %398 = vmatpush1.msra.mxu0 %v359
        %399 = vmatprep.subr.mxu0 0.0
        %400 = vmatpush1.msra.mxu0 0.0
        %401 = vmatprep.subr.mxu0 0.0
        %402 = vmatpush1.msra.mxu0 0.0
        %403 = vmatprep.subr.mxu0 0.0
        %404 = vmatpush1.msra.mxu0 0.0
        %405 = vmatprep.subr.mxu0 0.0
        %406 = vmatpush1.msra.mxu0 0.0
        %407 = vmatprep.subr.mxu0 0.0
        %408 = vmatpush1.msra.mxu0 0.0
        %409 = vmatprep.subr.mxu0 0.0
        %410 = vmatpush1.msra.mxu0 0.0
        %411 = vmatprep.subr.mxu0 0.0
        %412 = vmatpush1.msra.mxu0 0.0
        %413 = vmatprep.subr.mxu0 0.0
        %414 = vmatpush1.msra.mxu0 0.0
        %415 = vmatprep.subr.mxu0 0.0
        %416 = vmatpush1.msra.mxu0 0.0
        %417 = vmatprep.subr.mxu0 0.0
        %418 = vmatpush1.msra.mxu0 0.0
        %419 = vmatprep.subr.mxu0 0.0
        %420 = vmatpush1.msra.mxu0 0.0
        %421 = vmatprep.subr.mxu0 0.0
        %422 = vmatpush1.msra.mxu0 0.0
        %423 = vmatprep.subr.mxu0 0.0
        %424 = vmatpush1.msra.mxu0 0.0
        %425 = vmatprep.subr.mxu0 0.0
        %426 = vmatpush1.msra.mxu0 0.0
        %427 = vmatprep.subr.mxu0 0.0
        %428 = vmatpush1.msra.mxu0 0.0
        %429 = vmatprep.subr.mxu0 0.0
        %430 = vmatpush1.msra.mxu0 0.0
        %431 = vmatprep.mubr.f32.mxu0 0.0
        %432 = vmatmul.mubr.f32.gmra.mrb[0].mxu0 %v343
        %v433 = vpop.f32.mrb[0].mxu0
        %v434 = vadd.f32 %v365, %v433
        %v435 = vpop.f32.mrb[0].mxu0
        %436 = vdwg.mxu0
        %v437 = vmul.f32 %v434, 0.5
        %v438 = vmul.f32 %v434, 0.70710677
        %v439 = verf.f32.pop %v438
        %v440 = vadd.f32 %v439, 1.0
        %v441 = vmul.f32 %v437, %v440
        %v442 = vld [vmem:[%s299] sm:$0xff]
        %v443 = vld [vmem:[%s299 + $0x8] sm:$0xff]
        %v444 = vld [vmem:[%s299 + $0x10] sm:$0xff]
        %v445 = vld [vmem:[%s299 + $0x18] sm:$0xff]
        %v446 = vld [vmem:[%s299 + $0x20] sm:$0xff]
        %v447 = vld [vmem:[%s299 + $0x28] sm:$0xff]
        %v448 = vld [vmem:[%s299 + $0x30] sm:$0xff]
        %v449 = vld [vmem:[%s299 + $0x38] sm:$0xff]
        %v450 = vld [vmem:[%s299 + $0x40] sm:$0xff]
        %v451 = vld [vmem:[%s299 + $0x48] sm:$0xff]
        %v452 = vld [vmem:[%s299 + $0x50] sm:$0xff]
        %v453 = vld [vmem:[%s299 + $0x58] sm:$0xff]
        %v454 = vld [vmem:[%s299 + $0x60] sm:$0xff]
        %v455 = vld [vmem:[%s299 + $0x68] sm:$0xff]
        %v456 = vld [vmem:[%s299 + $0x70] sm:$0xff]
        %v457 = vld [vmem:[%s299 + $0x78] sm:$0xff]
        %458 = vmatprep.subr.mxu0 0.0
        %459 = vmatpush1.msra.mxu0 %v442
        %460 = vmatprep.subr.mxu0 0.0
        %461 = vmatpush1.msra.mxu0 %v443
        %462 = vmatprep.subr.mxu0 0.0
        %463 = vmatpush1.msra.mxu0 %v444
        %464 = vmatprep.subr.mxu0 0.0
        %465 = vmatpush1.msra.mxu0 %v445
        %466 = vmatprep.subr.mxu0 0.0
        %467 = vmatpush1.msra.mxu0 %v446
        %468 = vmatprep.subr.mxu0 0.0
        %469 = vmatpush1.msra.mxu0 %v447
        %470 = vmatprep.subr.mxu0 0.0
        %471 = vmatpush1.msra.mxu0 %v448
        %472 = vmatprep.subr.mxu0 0.0
        %473 = vmatpush1.msra.mxu0 %v449
        %474 = vmatprep.subr.mxu0 0.0
        %475 = vmatpush1.msra.mxu0 %v450
        %476 = vmatprep.subr.mxu0 0.0
        %477 = vmatpush1.msra.mxu0 %v451
        %478 = vmatprep.subr.mxu0 0.0
        %479 = vmatpush1.msra.mxu0 %v452
        %480 = vmatprep.subr.mxu0 0.0
        %481 = vmatpush1.msra.mxu0 %v453
        %482 = vmatprep.subr.mxu0 0.0
        %483 = vmatpush1.msra.mxu0 %v454
        %484 = vmatprep.subr.mxu0 0.0
        %485 = vmatpush1.msra.mxu0 %v455
        %486 = vmatprep.subr.mxu0 0.0
        %487 = vmatpush1.msra.mxu0 %v456
        %488 = vmatprep.subr.mxu0 0.0
        %489 = vmatpush1.msra.mxu0 %v457
        %490 = vmatprep.subr.mxu0 0.0
        %491 = vmatpush1.msra.mxu0 0.0
        %492 = vmatprep.subr.mxu0 0.0
        %493 = vmatpush1.msra.mxu0 0.0
        %494 = vmatprep.subr.mxu0 0.0
        %495 = vmatpush1.msra.mxu0 0.0
        %496 = vmatprep.subr.mxu0 0.0
        %497 = vmatpush1.msra.mxu0 0.0
        %498 = vmatprep.subr.mxu0 0.0
        %499 = vmatpush1.msra.mxu0 0.0
        %500 = vmatprep.subr.mxu0 0.0
        %501 = vmatpush1.msra.mxu0 0.0
        %502 = vmatprep.subr.mxu0 0.0
        %503 = vmatpush1.msra.mxu0 0.0
        %504 = vmatprep.subr.mxu0 0.0
        %505 = vmatpush1.msra.mxu0 0.0
        %506 = vmatprep.subr.mxu0 0.0
        %507 = vmatpush1.msra.mxu0 0.0
        %508 = vmatprep.subr.mxu0 0.0
        %509 = vmatpush1.msra.mxu0 0.0
        %510 = vmatprep.subr.mxu0 0.0
        %511 = vmatpush1.msra.mxu0 0.0
        %512 = vmatprep.subr.mxu0 0.0
        %513 = vmatpush1.msra.mxu0 0.0
        %514 = vmatprep.subr.mxu0 0.0
        %515 = vmatpush1.msra.mxu0 0.0
        %516 = vmatprep.subr.mxu0 0.0
        %517 = vmatpush1.msra.mxu0 0.0
        %518 = vmatprep.subr.mxu0 0.0
        %519 = vmatpush1.msra.mxu0 0.0
        %520 = vmatprep.subr.mxu0 0.0
        %521 = vmatpush1.msra.mxu0 0.0
        %522 = vmatprep.mubr.f32.mxu0 0.0
        %523 = vmatmul.mubr.f32.gmra.mrb[0].mxu0 %v441
        %v524 = vpop.f32.mrb[0].mxu0
        %v525 = vadd.f32 0.0, %v524
        %v526 = vpop.f32.mrb[0].mxu0
        %527 = vdwg.mxu0
        %p528 = scmp.eq.s32.totalorder %s30, 0
        // Predicated region
        $region53: #{tpu_custom_call.1} parent=39 // pred_check
          %p529 = pneg %p528
        $region54: #{tpu_custom_call.1} parent=39 // pred_check_branch
          %531 = sbr.rel (%p529) target = $region56
        $region55: #{tpu_custom_call.1} parent=39 // pred_region
          %v532 = vld [vmem:[%s4] sm:$0x1]
          %v534 = vlaneseq
          %v535 = vshrl.u32 %v534, 7
          %v536 = vsub.s32 0, %v535
          %v537 = vrot.slane %v532, %v536
          %v539 = vadd.f32 %v525, %v537
          %540 = vst [vmem:[%s338] sm:$0xff] %v539
        $region56: #{tpu_custom_call.1} parent=39 // pred_fallthru
          _
        %p541 = scmp.ne.s32.totalorder %s30, 0
        // Predicated region
        $region57: #{tpu_custom_call.1} parent=39 // pred_check
          %p542 = pneg %p541
        $region58: #{tpu_custom_call.1} parent=39 // pred_check_branch
          %544 = sbr.rel (%p542) target = $region60
        $region59: #{tpu_custom_call.1} parent=39 // pred_region
          %v545 = vld [vmem:[%s338] sm:$0xff]
          %v546 = vadd.f32 %v545, %v525
          %547 = vst [vmem:[%s338] sm:$0xff] %v546
        $region60: #{tpu_custom_call.1} parent=39 // pred_fallthru
          _
        %s548 = sand.u32 %s170, 1
        %s549 = scalar_lea.sflag [#allocation4], %s548
        %s550 = sand.u32 %s170, 1
        %s551 = smul.addr %s550, 8
        %s552 = scalar_lea.vmem [#allocation8], %s551
        // Predicated region
        $region61: #{tpu_custom_call.1} parent=39 // pred_check
          %p553 = pneg %p180
        $region62: #{tpu_custom_call.1} parent=39 // pred_check_branch
          %555 = sbr.rel (%p553) target = $region64
        $region63: #{tpu_custom_call.1} parent=39 // pred_region
          %s557 = ssub.s32 128, 128
          %558 = vsyncadd %s549, %s557
          %s559 = smul.addr %s29, 128
          %s560 = scalar_lea.hbm %s5, %s559
          %s562 = sshll.u32 %s552, 4
          %s563 = int_to_ptr.vmem [resolvable:$true] %s562
          %565 = dma.vmem_to_hbm [thread:$0]  %s563, 128, %s560, %s549
        $region64: #{tpu_custom_call.1} parent=39 // pred_fallthru
          _
      $region40: #{tpu_custom_call.1} parent=5 // pred_fallthru
        _
      %p566 = scmp.le.s32.totalorder 2, %s20
      // Predicated region
      $region65: #{tpu_custom_call.1} parent=5 // pred_check
        %p567 = pneg %p566
      $region66: #{tpu_custom_call.1} parent=5 // pred_check_branch
        %569 = sbr.rel (%p567) target = $region68
      $region67: #{tpu_custom_call.1} parent=5 // pred_region
        %s570 = ssub.s32 %s20, 2
        // Predicated region
        $region69: #{tpu_custom_call.1} parent=67 // pred_check
          %p571 = pneg %p186
        $region70: #{tpu_custom_call.1} parent=67 // pred_check_branch
          %573 = sbr.rel (%p571) target = $region72
        $region71: #{tpu_custom_call.1} parent=67 // pred_region
          %s574 = sand.u32 %s171, 1
          %s575 = scalar_lea.sflag [#allocation4], %s574
          %s576 = sand.u32 %s171, 1
          %s577 = smul.addr %s576, 8
          %s578 = scalar_lea.vmem [#allocation8], %s577
          %579 = dma.done %s575, 128
        $region72: #{tpu_custom_call.1} parent=67 // pred_fallthru
          _
      $region68: #{tpu_custom_call.1} parent=5 // pred_fallthru
        _
    $region6: #{tpu_custom_call.1} parent=1 // loop_footer
      %s24 = sadd.s32 1, %s20
    $region7: #{tpu_custom_call.1} parent=1 // loop_footer_branch
      %19 = sbr.rel target = $region3
    $region8: #{tpu_custom_call.1} parent=1 // loop_exit
      _
    %580 = vsyncpa [#allocation3], 1
    %s581 = scalar_lea.sflag [#allocation3], 1
    %582 = vsyncpa %s581, 1
    %583 = vsyncpa [#allocation6], 1
    %s584 = scalar_lea.sflag [#allocation6], 1
    %585 = vsyncpa %s584, 1
    %586 = vsyncpa [#allocation4], 1
    %s587 = scalar_lea.sflag [#allocation4], 1
    %588 = vsyncpa %s587, 1

</llo_original>
